<compile_context>
chip_gen: v6e
topology: v6e:2x2x1
jax: 0.10.0
libtpu: 0.0.40
codegen_flags: <defaults>
</compile_context>

<pallas_src>
import functools

import jax
import jax.numpy as jnp
from jax.experimental import pallas as pl
from jax.experimental.pallas import tpu as pltpu


def _round_up(a, m):
    return ((a + m - 1) // m) * m


# ---------------------------------------------------------------------------
# Fast path: centers resident in VMEM, gather via one-hot MXU matmul.
# ---------------------------------------------------------------------------
def _center_loss_resident_kernel(labels_ref, x_ref, centers_ref, out_ref, acc,
                                 *, batch_tile, tiles_per_split, num_classes,
                                 b_true):
    p = pl.program_id(0)          # megacore split
    i = pl.program_id(1)          # batch tile within split
    n_i = pl.num_programs(1)

    @pl.when(i == 0)
    def _init():
        acc[...] = jnp.zeros_like(acc)

    x = x_ref[...].astype(jnp.float32)                                  # (tb, D)
    labels = labels_ref[...]                                            # (tb, 1) int32
    classes = jax.lax.broadcasted_iota(jnp.int32, (batch_tile, num_classes), 1)
    onehot = (labels == classes).astype(jnp.float32)                    # (tb, C)
    # Gather centers[labels] with the MXU (centers are VMEM-resident).
    c = jnp.dot(onehot, centers_ref[...].astype(jnp.float32),
                preferred_element_type=jnp.float32)                     # (tb, D)

    diff = x - c
    d = jnp.sum(diff * diff, axis=1, keepdims=True)                     # (tb, 1)
    d = jnp.clip(d, 1e-12, 1e12)                                        # matched-entry clamp

    # Mask padded rows (global row index >= true batch size).
    row = jax.lax.broadcasted_iota(jnp.int32, (batch_tile, 1), 0)
    tile_idx = p * tiles_per_split + i
    valid = (tile_idx * batch_tile + row) < b_true
    acc[...] += jnp.where(valid, d, 0.0)

    @pl.when(i == n_i - 1)
    def _finalize():
        out_ref[...] = jnp.zeros_like(out_ref) + jnp.sum(acc[...])


# ---------------------------------------------------------------------------
# Fallback path: centers stay in HBM; per-row gather DMAs, double-buffered,
# one shared DMA semaphore per buffer slot.
# ---------------------------------------------------------------------------
def _center_loss_hbm_kernel(labels_sm, x_ref, centers_hbm, out_ref,
                            cbuf, sems, acc,
                            *, batch_tile, tiles_per_split, b_true):
    p = pl.program_id(0)
    i = pl.program_id(1)
    n_i = pl.num_programs(1)
    tile_idx = p * tiles_per_split + i

    def issue_gather(t_idx, slot):
        # One row DMA per sample of tile t_idx, all signaling the slot's sem.
        base = t_idx * batch_tile

        @pl.loop(0, batch_tile)
        def _issue(r):
            lab = labels_sm[base + r]                 # scalar read from SMEM
            pltpu.make_async_copy(
                centers_hbm.at[pl.ds(lab, 1), :],
                cbuf.at[pl.ds(slot * batch_tile + r, 1), :],
                sems.at[slot],
            ).start()

    @pl.when(i == 0)
    def _prime():
        acc[...] = jnp.zeros_like(acc)
        issue_gather(tile_idx, 0)                     # prime slot 0

    @pl.when(i + 1 < n_i)
    def _prefetch_next():
        # Prefetch next tile's center rows into the other slot (hides HBM
        # gather latency behind this tile's compute).
        issue_gather(tile_idx + 1, (i + 1) % 2)

    slot = i % 2
    # Wait for the batch_tile row copies of the current slot: one wait per row
    # against the shared slot semaphore (each descriptor matches a row copy).
    @pl.loop(0, batch_tile)
    def _wait(_):
        pltpu.make_async_copy(
            centers_hbm.at[pl.ds(0, 1), :],
            cbuf.at[pl.ds(0, 1), :],
            sems.at[slot],
        ).wait()

    x = x_ref[...].astype(jnp.float32)                                  # (tb, D)
    c_start = pl.multiple_of(slot * batch_tile, batch_tile)
    c = cbuf[pl.ds(c_start, batch_tile), :].astype(jnp.float32)         # (tb, D)

    diff = x - c
    d = jnp.sum(diff * diff, axis=1, keepdims=True)
    d = jnp.clip(d, 1e-12, 1e12)

    row = jax.lax.broadcasted_iota(jnp.int32, (batch_tile, 1), 0)
    valid = (tile_idx * batch_tile + row) < b_true
    acc[...] += jnp.where(valid, d, 0.0)

    @pl.when(i == n_i - 1)
    def _finalize():
        out_ref[...] = jnp.zeros_like(out_ref) + jnp.sum(acc[...])


# ---------------------------------------------------------------------------
# Wrapper
# ---------------------------------------------------------------------------
def center_loss(x, centers, labels, *, batch_tile=None, resident_centers=None,
                n_splits=None):
    """CenterLoss forward.

    x: (B, D) float, centers: (C, D) float, labels: (B,) int in [0, C).
    Returns the scalar loss with PyTorch's clamp-after-mask semantics.
    """
    B, D = x.shape
    C, D2 = centers.shape
    assert D == D2, (x.shape, centers.shape)
    labels = labels.astype(jnp.int32)
    itemsize = jnp.dtype(centers.dtype).itemsize

    # Resident-centers path when centers fit a small VMEM budget.
    if resident_centers is None:
        resident_centers = (C * D * itemsize) <= (2 << 20)

    # Tile sizing from VMEM: target ~2 MiB x-blocks; keep the in-kernel
    # one-hot (tb, C) mask bounded on the resident path; multiple of 8.
    if batch_tile is None:
        bt = min(512, (2 << 20) // (4 * max(D, 1)))
        if resident_centers:
            bt = min(bt, (2 << 20) // (4 * max(C, 1)))
        bt = max(8, (bt // 8) * 8)
        batch_tile = min(bt, _round_up(B, 8))
    assert batch_tile % 8 == 0 and batch_tile > 0

    tiles_needed = pl.cdiv(B, batch_tile)
    if n_splits is None:
        n_splits = 2 if tiles_needed >= 2 else 1      # v7x megacore split
    tiles_per_split = pl.cdiv(tiles_needed, n_splits)
    total_tiles = n_splits * tiles_per_split
    b_pad = total_tiles * batch_tile

    # Pad batch to the tile grid; padded rows use class 0 (in range for the
    # gather) and are masked out of the reduction in-kernel.
    # Note: out-of-range labels are not guarded (same assumption as PyTorch).
    if b_pad != B:
        x = jnp.pad(x, ((0, b_pad - B), (0, 0)))
        labels = jnp.pad(labels, (0, b_pad - B))

    extra = float(B) * float(C - 1) * 1e-12           # clamp(0)=1e-12 per masked-out entry
    out_shape = jax.ShapeDtypeStruct((n_splits, 8, 128), jnp.float32)
    x_bytes = batch_tile * D * jnp.dtype(x.dtype).itemsize

    if resident_centers:
        kernel = functools.partial(
            _center_loss_resident_kernel,
            batch_tile=batch_tile, tiles_per_split=tiles_per_split,
            num_classes=C, b_true=B)
        grid_spec = pltpu.PrefetchScalarGridSpec(
            num_scalar_prefetch=0,
            grid=(n_splits, tiles_per_split),
            in_specs=[
                pl.BlockSpec((batch_tile, 1),
                             lambda p, i, _t=tiles_per_split: (p * _t + i, 0)),
                pl.BlockSpec((batch_tile, D),
                             lambda p, i, _t=tiles_per_split: (p * _t + i, 0)),
                pl.BlockSpec((C, D), lambda p, i: (0, 0)),   # resident centers
            ],
            out_specs=pl.BlockSpec((1, 8, 128), lambda p, i: (p, 0, 0)),
            scratch_shapes=[pltpu.VMEM((batch_tile, 1), jnp.float32)],
        )
        vmem_needed = (2 * (x_bytes + batch_tile * 4)
                       + 2 * C * D * itemsize
                       + 2 * batch_tile * C * 4
                       + (1 << 20))
        args = (labels.reshape(b_pad, 1), x, centers)
    else:
        kernel = functools.partial(
            _center_loss_hbm_kernel,
            batch_tile=batch_tile, tiles_per_split=tiles_per_split, b_true=B)
        grid_spec = pltpu.PrefetchScalarGridSpec(
            num_scalar_prefetch=1,                    # labels -> SMEM
            grid=(n_splits, tiles_per_split),
            in_specs=[
                pl.BlockSpec((batch_tile, D),
                             lambda p, i, lbl, _t=tiles_per_split: (p * _t + i, 0)),
                pl.BlockSpec(memory_space=pl.ANY),    # centers stay in HBM
            ],
            out_specs=pl.BlockSpec((1, 8, 128), lambda p, i, lbl: (p, 0, 0)),
            scratch_shapes=[
                pltpu.VMEM((2 * batch_tile, D), centers.dtype),  # double-buffered gather
                pltpu.SemaphoreType.DMA((2,)),                   # one shared sem per slot
                pltpu.VMEM((batch_tile, 1), jnp.float32),        # per-row accumulator
            ],
        )
        vmem_needed = (2 * x_bytes + 2 * batch_tile * D * itemsize + (1 << 20))
        args = (labels, x, centers)

    vmem_limit = int(min(64 << 20, max(2 * vmem_needed, 16 << 20)))
    out = pl.pallas_call(
        kernel,
        out_shape=out_shape,
        grid_spec=grid_spec,
        compiler_params=pltpu.CompilerParams(
            dimension_semantics=("parallel", "arbitrary"),
            vmem_limit_bytes=vmem_limit,
        ),
    )(*args)

    partials = out[:, 0, 0]
    return (jnp.sum(partials) + extra) / B


if __name__ == "__main__":
    batch, feat_dim, num_classes = 16, 32, 16

    key = jax.random.PRNGKey(0)
    kx, kc, kl = jax.random.split(key, 3)

    x = jax.random.normal(kx, (batch, feat_dim), dtype=jnp.float32)
    centers = jax.random.normal(kc, (num_classes, feat_dim), dtype=jnp.float32)
    labels = jax.random.randint(kl, (batch,), 0, num_classes, dtype=jnp.int32)

    def reference(xv, cv, lv):
        b = xv.shape[0]
        c = cv.shape[0]
        distmat = (jnp.sum(xv ** 2, axis=1, keepdims=True)
                   + jnp.sum(cv ** 2, axis=1, keepdims=True).T
                   - 2.0 * (xv @ cv.T))
        mask = (lv[:, None] == jnp.arange(c)[None, :]).astype(xv.dtype)
        return jnp.sum(jnp.clip(distmat * mask, 1e-12, 1e12)) / b

    # 1) Resident-centers fast path (default for small C*D).
    loss = jax.block_until_ready(center_loss(x, centers, labels))
    ref = reference(x, centers, labels)
    assert jnp.allclose(loss, ref, rtol=1e-4, atol=1e-4), (loss, ref)

    # 2) HBM-gather fallback: double-buffered row DMAs, ragged batch (padding
    #    + masking) and the 2-way split grid.
    b2 = 21
    x2 = jax.random.normal(kx, (b2, feat_dim), dtype=jnp.float32)
    l2 = jax.random.randint(kl, (b2,), 0, num_classes, dtype=jnp.int32)
    loss2 = jax.block_until_ready(
        center_loss(x2, centers, l2, batch_tile=8,
                    resident_centers=False, n_splits=2))
    ref2 = reference(x2, centers, l2)
    assert jnp.allclose(loss2, ref2, rtol=1e-4, atol=1e-4), (loss2, ref2)

    # 3) Resident path with padding + multi-tile accumulation.
    loss3 = jax.block_until_ready(
        center_loss(x2, centers, l2, batch_tile=8,
                    resident_centers=True, n_splits=2))
    assert jnp.allclose(loss3, ref2, rtol=1e-4, atol=1e-4), (loss3, ref2)

    print("KERNEL_OK")
</pallas_src>

<mosaic_0001>
module attributes {stable_mosaic.version = 11 : i64} {
  func.func @_center_loss_resident_kernel(%arg0: i32, %arg1: i32, %arg2: memref<16x1xi32, #tpu.memory_space<vmem>>, %arg3: memref<16x32xf32, #tpu.memory_space<vmem>>, %arg4: memref<16x32xf32, #tpu.memory_space<vmem>>, %arg5: memref<1x8x128xf32, #tpu.memory_space<vmem>>, %arg6: memref<16x1xf32, #tpu.memory_space<vmem>>) attributes {dimension_semantics = [#tpu.dimension_semantics<parallel>, #tpu.dimension_semantics<arbitrary>], iteration_bounds = array<i64: 1, 1>, scalar_prefetch = 0 : i64, scratch_operands = 1 : i64, tpu.core_type = #tpu.core_type<tc>, window_params = [{transform_indices = @transform_0, window_bounds = array<i64: 16, 1>}, {transform_indices = @transform_1, window_bounds = array<i64: 16, 32>}, {pipeline_mode = #tpu.pipeline_mode<synchronous>, transform_indices = @transform_2, window_bounds = array<i64: 16, 32>}, {transform_indices = @transform_3, window_bounds = array<i64: 1, 8, 128>}]} {
    %c0_i32 = arith.constant 0 : i32
    %0 = arith.cmpi eq, %arg1, %c0_i32 : i32
    %1 = arith.extui %0 : i1 to i32
    %c0_i32_0 = arith.constant 0 : i32
    %2 = arith.cmpi ne, %1, %c0_i32_0 : i32
    scf.if %2 {
      %cst_17 = arith.constant 0.000000e+00 : f32
      %36 = vector.broadcast %cst_17 : f32 to vector<16x1xf32>
      %c0_18 = arith.constant 0 : index
      %c0_19 = arith.constant 0 : index
      %37 = vector.load %arg6[%c0_18, %c0_19] : memref<16x1xf32, #tpu.memory_space<vmem>>, vector<16x1xf32>
      tpu.vector_store %arg6[%c0_18, %c0_19], %36 {strides = array<i32>} : memref<16x1xf32, #tpu.memory_space<vmem>>, vector<16x1xf32>,
    } else {
    }
    %c0 = arith.constant 0 : index
    %c0_1 = arith.constant 0 : index
    %3 = vector.load %arg3[%c0, %c0_1] : memref<16x32xf32, #tpu.memory_space<vmem>>, vector<16x32xf32>
    %c0_2 = arith.constant 0 : index
    %c0_3 = arith.constant 0 : index
    %4 = vector.load %arg2[%c0_2, %c0_3] : memref<16x1xi32, #tpu.memory_space<vmem>>, vector<16x1xi32>
    %5 = tpu.iota {dimensions = array<i32: 1>} : vector<16x16xi32>
    %6 = vector.broadcast %4 : vector<16x1xi32> to vector<16x16xi32>
    %7 = arith.cmpi eq, %6, %5 : vector<16x16xi32>
    %8 = arith.extui %7 : vector<16x16xi1> to vector<16x16xi32>
    %9 = arith.sitofp %8 : vector<16x16xi32> to vector<16x16xf32>
    %c0_4 = arith.constant 0 : index
    %c0_5 = arith.constant 0 : index
    %10 = vector.load %arg4[%c0_4, %c0_5] : memref<16x32xf32, #tpu.memory_space<vmem>>, vector<16x32xf32>
    %cst = arith.constant dense<0.000000e+00> : vector<16x32xf32>
    %11 = tpu.matmul %9, %10, %cst {dimension_numbers = #tpu.dot_dimension_numbers<[1], [0], [0], [1], [0, 0, 1, 1], [], []>} : vector<16x16xf32>, vector<16x32xf32>, vector<16x32xf32> -> vector<16x32xf32>
    %12 = arith.subf %3, %11 : vector<16x32xf32>
    %13 = arith.mulf %12, %12 : vector<16x32xf32>
    %cst_6 = arith.constant dense<0.000000e+00> : vector<16xf32>
    %14 = vector.multi_reduction <add>, %13, %cst_6 [1] : vector<16x32xf32> to vector<16xf32>
    %15 = vector.shape_cast %14 : vector<16xf32> to vector<16x1xf32>
    %cst_7 = arith.constant 9.99999996E-13 : f32
    %cst_8 = arith.constant 9.99999995E+11 : f32
    %16 = vector.broadcast %cst_7 : f32 to vector<16x1xf32>
    %17 = arith.maximumf %16, %15 : vector<16x1xf32>
    %18 = vector.broadcast %cst_8 : f32 to vector<16x1xf32>
    %19 = arith.minimumf %18, %17 : vector<16x1xf32>
    %20 = tpu.iota {dimensions = array<i32: 0>} : vector<16x1xi32>
    %c1_i32 = arith.constant 1 : i32
    %21 = arith.muli %arg0, %c1_i32 : i32
    %22 = arith.addi %21, %arg1 : i32
    %c16_i32 = arith.constant 16 : i32
    %23 = arith.muli %22, %c16_i32 : i32
    %24 = vector.broadcast %23 : i32 to vector<16x1xi32>
    %25 = arith.addi %24, %20 : vector<16x1xi32>
    %c16_i32_9 = arith.constant 16 : i32
    %26 = vector.broadcast %c16_i32_9 : i32 to vector<16x1xi32>
    %27 = arith.cmpi slt, %25, %26 : vector<16x1xi32>
    %c0_10 = arith.constant 0 : index
    %c0_11 = arith.constant 0 : index
    %28 = vector.load %arg6[%c0_10, %c0_11] : memref<16x1xf32, #tpu.memory_space<vmem>>, vector<16x1xf32>
    %cst_12 = arith.constant 0.000000e+00 : f32
    %29 = vector.broadcast %cst_12 : f32 to vector<16x1xf32>
    %30 = arith.select %27, %19, %29 : vector<16x1xi1>, vector<16x1xf32>
    %31 = arith.addf %28, %30 : vector<16x1xf32>
    %c0_13 = arith.constant 0 : index
    %c0_14 = arith.constant 0 : index
    %32 = vector.load %arg6[%c0_13, %c0_14] : memref<16x1xf32, #tpu.memory_space<vmem>>, vector<16x1xf32>
    tpu.vector_store %arg6[%c0_13, %c0_14], %31 {strides = array<i32>} : memref<16x1xf32, #tpu.memory_space<vmem>>, vector<16x1xf32>,
    %c0_i32_15 = arith.constant 0 : i32
    %33 = arith.cmpi eq, %arg1, %c0_i32_15 : i32
    %34 = arith.extui %33 : i1 to i32
    %c0_i32_16 = arith.constant 0 : i32
    %35 = arith.cmpi ne, %34, %c0_i32_16 : i32
    scf.if %35 {
      %cst_17 = arith.constant 0.000000e+00 : f32
      %36 = vector.broadcast %cst_17 : f32 to vector<1x8x128xf32>
      %c0_18 = arith.constant 0 : index
      %c0_19 = arith.constant 0 : index
      %37 = vector.load %arg6[%c0_18, %c0_19] : memref<16x1xf32, #tpu.memory_space<vmem>>, vector<16x1xf32>
      %38 = vector.shape_cast %37 : vector<16x1xf32> to vector<1x16x1xf32>
      %cst_20 = arith.constant dense<0.000000e+00> : vector<1xf32>
      %39 = vector.multi_reduction <add>, %38, %cst_20 [1, 2] : vector<1x16x1xf32> to vector<1xf32>
      %40 = vector.shape_cast %39 : vector<1xf32> to vector<1x1x1xf32>
      %41 = vector.extract %40[0, 0, 0] : f32 from vector<1x1x1xf32>
      %42 = vector.broadcast %41 : f32 to vector<1x8x128xf32>
      %43 = arith.addf %36, %42 : vector<1x8x128xf32>
      %c0_21 = arith.constant 0 : index
      %c0_22 = arith.constant 0 : index
      %c0_23 = arith.constant 0 : index
      %44 = vector.load %arg5[%c0_21, %c0_22, %c0_23] : memref<1x8x128xf32, #tpu.memory_space<vmem>>, vector<1x8x128xf32>
      tpu.vector_store %arg5[%c0_21, %c0_22, %c0_23], %43 {strides = array<i32>} : memref<1x8x128xf32, #tpu.memory_space<vmem>>, vector<1x8x128xf32>,
    } else {
    }
    return
  }
  func.func @transform_0(%arg0: i32, %arg1: i32) -> (i32, i32) {
    %c1_i32 = arith.constant 1 : i32
    %0 = arith.muli %arg0, %c1_i32 : i32
    %1 = arith.addi %0, %arg1 : i32
    %c0_i32 = arith.constant 0 : i32
    %c0_i32_0 = arith.constant 0 : i32
    return %1, %c0_i32 : i32, i32
  }
  func.func @transform_1(%arg0: i32, %arg1: i32) -> (i32, i32) {
    %c1_i32 = arith.constant 1 : i32
    %0 = arith.muli %arg0, %c1_i32 : i32
    %1 = arith.addi %0, %arg1 : i32
    %c0_i32 = arith.constant 0 : i32
    %c0_i32_0 = arith.constant 0 : i32
    return %1, %c0_i32 : i32, i32
  }
  func.func @transform_2(%arg0: i32, %arg1: i32) -> (i32, i32) {
    %c0_i32 = arith.constant 0 : i32
    %c0_i32_0 = arith.constant 0 : i32
    %c0_i32_1 = arith.constant 0 : i32
    return %c0_i32, %c0_i32_0 : i32, i32
  }
  func.func @transform_3(%arg0: i32, %arg1: i32) -> (i32, i32, i32) {
    %c0_i32 = arith.constant 0 : i32
    %c0_i32_0 = arith.constant 0 : i32
    %c0_i32_1 = arith.constant 0 : i32
    return %arg0, %c0_i32, %c0_i32_0 : i32, i32, i32
  }
}

</mosaic_0001>

<llo_original>
// kernel: tpu_custom_call.1
$region0: #{tpu_custom_call.1}
  #allocation0 [shape = 'u32[]', space=smem, size = 0x4, offset = 0x4, fixed_abs, tag = 'smem constant byte address 0x4 - core index']
  #allocation1 [shape = 'u32[144,128]{1,0:T(1,128)}', space=vmem, size = 0x12000, scoped, tag = 'internal scratch']
  #allocation2 [shape = 'f32[16,1]{1,0:T(8,128)}', space=vmem, size = 0x2000, scoped, tag = 'scratch operand']
  %s0 = inlined_call_operand.vmem [shape: s32[16,1], index: 0, kind: input, shape index: {}]
  %s1 = inlined_call_operand.vmem [shape: f32[16,32], index: 1, kind: input, shape index: {}]
  %s2 = inlined_call_operand.hbm [shape: f32[16,32], index: 2, kind: input, shape index: {}]
  %s3 = inlined_call_operand.hbm [shape: f32[1,8,128], index: 3, kind: output, shape index: {}]
  %s4 = sld [smem:[#allocation0]]
  $region34: #{tpu_custom_call.1} parent=0
    _
  %s6 = ssub.s32 1, %s4
  %s7 = scalar_select 0, %s6, %s4
  $region1: #{tpu_custom_call.1} parent=0
    #allocation3 [shape = 'u8[8192]{0}', space=vmem, size = 0x2000, scoped, tag = 'input window, operand 2, single buffered']
    #allocation4 [shape = 's32[1]{0}', space=sflag, size = 0x4, scoped, tag = 'scoped memory for tpu_custom_call.1']
    #allocation5 [shape = 's32[1]{0}', space=sflag, size = 0x4, scoped, tag = 'scoped memory for tpu_custom_call.1']
    #allocation6 [shape = 'u8[4096]{0}', space=vmem, size = 0x1000, scoped, tag = 'output window, operand 0, single buffered']
    %8 = vsyncpa [#allocation4], 0
    %9 = vsyncpa [#allocation5], 0
    // Predicated region
    $region2: #{tpu_custom_call.1} parent=1 // pred_check
      _
    $region3: #{tpu_custom_call.1} parent=1 // pred_check_branch
      %11 = sbr.rel (0) target = $region5
    $region4: #{tpu_custom_call.1} parent=1 // pred_region
      %s12 = sadd.s32 0, 0
      %s13 = smul.u32 2, %s12
      %p14 = scmp.lt.s32.totalorder %s13, 1
      %s15 = scalar_select %p14, %s13, 1
      %s16 = smul.addr %s15, 8
      %s17 = scalar_lea.vmem %s0, %s16
      %s18 = sadd.s32 0, 0
      %s19 = smul.u32 2, %s18
    $region5: #{tpu_custom_call.1} parent=1 // pred_fallthru
      _
    // Predicated region
    $region6: #{tpu_custom_call.1} parent=1 // pred_check
      _
    $region7: #{tpu_custom_call.1} parent=1 // pred_check_branch
      %21 = sbr.rel (0) target = $region9
    $region8: #{tpu_custom_call.1} parent=1 // pred_region
      %s22 = sadd.s32 0, 0
      %s23 = smul.u32 2, %s22
      %p24 = scmp.lt.s32.totalorder %s23, 1
      %s25 = scalar_select %p24, %s23, 1
      %s26 = smul.addr %s25, 8
      %s27 = scalar_lea.vmem %s1, %s26
      %s28 = sadd.s32 0, 0
      %s29 = smul.u32 2, %s28
    $region9: #{tpu_custom_call.1} parent=1 // pred_fallthru
      _
    // Predicated region
    $region10: #{tpu_custom_call.1} parent=1 // pred_check
      _
    $region11: #{tpu_custom_call.1} parent=1 // pred_check_branch
      %31 = sbr.rel (0) target = $region13
    $region12: #{tpu_custom_call.1} parent=1 // pred_region
      %s33 = ssub.s32 256, 256
      %34 = vsyncadd [#allocation4], %s33
      %s35 = sshll.u32 [#allocation3], 4
      %s36 = int_to_ptr.vmem [resolvable:$true] %s35
      %41 = dma.hbm_to_vmem [thread:$0]  %s2, 256, %s36, [#allocation4], 128, 128, 8
    $region13: #{tpu_custom_call.1} parent=1 // pred_fallthru
      _
    // Predicated region
    $region14: #{tpu_custom_call.1} parent=1 // pred_check
      _
    $region15: #{tpu_custom_call.1} parent=1 // pred_check_branch
      %43 = sbr.rel (0) target = $region17
    $region16: #{tpu_custom_call.1} parent=1 // pred_region
      %44 = dma.done [#allocation4], 256
    $region17: #{tpu_custom_call.1} parent=1 // pred_fallthru
      _
    %s45 = sadd.s32 0, 0
    %s46 = smul.u32 2, %s45
    %p47 = scmp.lt.s32.totalorder %s46, 1
    %s48 = scalar_select %p47, %s46, 1
    %s49 = smul.addr %s48, 8
    %s50 = scalar_lea.vmem %s0, %s49
    %s51 = sadd.s32 0, 0
    %s52 = smul.u32 2, %s51
    %p53 = scmp.lt.s32.totalorder %s52, 1
    %s54 = scalar_select %p53, %s52, 1
    %s55 = smul.addr %s54, 8
    %s56 = scalar_lea.vmem %s1, %s55
    %s57 = sadd.s32 0, 0
    %s58 = smul.u32 2, %s57
    %p59 = scmp.lt.s32.totalorder %s58, 1
    %s60 = scalar_select %p59, %s58, 1
    %s61 = smul.addr %s60, 8
    %s62 = scalar_lea.vmem %s0, %s61
    %s63 = sadd.s32 0, 0
    %s64 = smul.u32 2, %s63
    %s65 = sadd.s32 0, 0
    %s66 = smul.u32 2, %s65
    %p67 = scmp.lt.s32.totalorder %s66, 1
    %s68 = scalar_select %p67, %s66, 1
    %s69 = smul.addr %s68, 8
    %s70 = scalar_lea.vmem %s1, %s69
    %s71 = sadd.s32 0, 0
    %s72 = smul.u32 2, %s71
    %p73 = scmp.eq.s32.totalorder 0, 0
    // Predicated region
    $region18: #{tpu_custom_call.1} parent=1 // pred_check
      %p74 = pneg %p73
    $region19: #{tpu_custom_call.1} parent=1 // pred_check_branch
      %76 = sbr.rel (%p74) target = $region21
    $region20: #{tpu_custom_call.1} parent=1 // pred_region
      %vm77 = vcmask 7168
      %78 = vst.msk [vmem:[#allocation2] sm:$0xff] %vm77, 0.0
      %79 = vst.msk [vmem:[#allocation2 + $0x8] sm:$0xff] %vm77, 0.0
    $region21: #{tpu_custom_call.1} parent=1 // pred_fallthru
      _
    %v80 = vld [vmem:[%s70] sm:$0xff]
    %v81 = vld [vmem:[%s70 + $0x8] sm:$0xff]
    %v82 = vld [vmem:[%s62] sm:$0xff]
    %v83 = vld [vmem:[%s62 + $0x8] sm:$0xff]
    %v84 = vlaneseq
    %v85 = vand.u32 %v84, 127
    %86 = vset.pattern.permute.xlu0 0
    %87 = vperm.xlu0 %86, %v82
    %v88 = vpop.permute.xlu0 %87
    %89 = vset.pattern.permute.xlu0 0
    %90 = vperm.xlu0 %89, %v83
    %v91 = vpop.permute.xlu0 %90
    %vm92 = vcmp.eq.s32.totalorder %v88, %v85
    %vm93 = vcmp.eq.s32.totalorder %v91, %v85
    %v94 = vsel %vm92, 1, 0
    %v95 = vsel %vm93, 1, 0
    %v96 = vcvt.s32.f32 %v94
    %v97 = vcvt.s32.f32 %v95
    %v98 = vld [vmem:[#allocation3] sm:$0xff]
    %v99 = vld [vmem:[#allocation3 + $0x8] sm:$0xff]
    %vm100 = vcmask 130048
    %v102 = vsel %vm100, %v96, 0
    %v105 = vsel %vm100, %v97, 0
    %107 = vmatprep.subr.mxu0 0.0
    %108 = vmatpush1.msra.mxu0 0.0
    %109 = vmatprep.subr.mxu0 0.0
    %110 = vmatpush1.msra.mxu0 0.0
    %111 = vmatprep.subr.mxu0 0.0
    %112 = vmatpush1.msra.mxu0 0.0
    %113 = vmatprep.subr.mxu0 0.0
    %114 = vmatpush1.msra.mxu0 0.0
    %115 = vmatprep.subr.mxu0 0.0
    %116 = vmatpush1.msra.mxu0 0.0
    %117 = vmatprep.subr.mxu0 0.0
    %118 = vmatpush1.msra.mxu0 0.0
    %119 = vmatprep.subr.mxu0 0.0
    %120 = vmatpush1.msra.mxu0 0.0
    %121 = vmatprep.subr.mxu0 0.0
    %122 = vmatpush1.msra.mxu0 0.0
    %123 = vmatprep.subr.mxu0 0.0
    %124 = vmatpush1.msra.mxu0 0.0
    %125 = vmatprep.subr.mxu0 0.0
    %126 = vmatpush1.msra.mxu0 0.0
    %127 = vmatprep.subr.mxu0 0.0
    %128 = vmatpush1.msra.mxu0 0.0
    %129 = vmatprep.subr.mxu0 0.0
    %130 = vmatpush1.msra.mxu0 0.0
    %131 = vmatprep.subr.mxu0 0.0
    %132 = vmatpush1.msra.mxu0 0.0
    %133 = vmatprep.subr.mxu0 0.0
    %134 = vmatpush1.msra.mxu0 0.0
    %135 = vmatprep.subr.mxu0 0.0
    %136 = vmatpush1.msra.mxu0 %v99
    %137 = vmatprep.subr.mxu0 0.0
    %138 = vmatpush1.msra.mxu0 %v98
    %139 = vmatprep.subr.mxu0 0.0
    %140 = vmatpush2.msra.mxu0 0.0
    %141 = vmatprep.subr.mxu0 0.0
    %142 = vmatpush2.msra.mxu0 0.0
    %143 = vmatprep.subr.mxu0 0.0
    %144 = vmatpush2.msra.mxu0 0.0
    %145 = vmatprep.subr.mxu0 0.0
    %146 = vmatpush2.msra.mxu0 0.0
    %147 = vmatprep.subr.mxu0 0.0
    %148 = vmatpush2.msra.mxu0 0.0
    %149 = vmatprep.subr.mxu0 0.0
    %150 = vmatpush2.msra.mxu0 0.0
    %151 = vmatprep.subr.mxu0 0.0
    %152 = vmatpush2.msra.mxu0 0.0
    %153 = vmatprep.subr.mxu0 0.0
    %154 = vmatpush2.msra.mxu0 0.0
    %155 = vmatprep.subr.mxu0 0.0
    %156 = vmatpush2.msra.mxu0 0.0
    %157 = vmatprep.subr.mxu0 0.0
    %158 = vmatpush2.msra.mxu0 0.0
    %159 = vmatprep.subr.mxu0 0.0
    %160 = vmatpush2.msra.mxu0 0.0
    %161 = vmatprep.subr.mxu0 0.0
    %162 = vmatpush2.msra.mxu0 0.0
    %163 = vmatprep.subr.mxu0 0.0
    %164 = vmatpush2.msra.mxu0 0.0
    %165 = vmatprep.subr.mxu0 0.0
    %166 = vmatpush2.msra.mxu0 0.0
    %167 = vmatprep.subr.mxu0 0.0
    %168 = vmatpush2.msra.mxu0 0.0
    %169 = vmatprep.subr.mxu0 0.0
    %170 = vmatpush2.msra.mxu0 0.0
    %171 = vmatprep.mubr.f32.mxu0 0.0
    %172 = vmatmul.mubr.f32.gmra.mxu0 %v102
    %v173 = vpop.f32.mrf.mxu0
    %v174 = vadd.f32 0.0, %v173
    %v175 = vpop.f32.mrf.mxu0
    %176 = vmatprep.mubr.f32.mxu0 0.0
    %177 = vmatmul.mubr.f32.gmra.mxu0 %v105
    %v178 = vpop.f32.mrf.mxu0
    %v179 = vadd.f32 0.0, %v178
    %v180 = vpop.f32.mrf.mxu0
    %181 = vdwg.mxu0
    %v182 = vsub.f32 %v80, %v174
    %v183 = vsub.f32 %v81, %v179
    %v184 = vmul.f32 %v182, %v182
    %v185 = vmul.f32 %v183, %v183
    %vm186 = vcmask 261120
    %v187 = vsel %vm186, %v184, 0.0
    %188 = vadd.xlane.f32.xlu0 %v187
    %v189 = vpop.xlane.xlu0 %188
    %v190 = vsel %vm186, %v185, 0.0
    %191 = vadd.xlane.f32.xlu0 %v190
    %v192 = vpop.xlane.xlu0 %191
    %v193 = vmax.f32 %v189, 1e-12
    %v194 = vmax.f32 %v192, 1e-12
    %v195 = vmin.f32 %v193, 1e+12
    %v196 = vmin.f32 %v194, 1e+12
    %v197 = vlaneseq
    %v198 = vshrl.u32 %v197, 7
    %v199 = vadd.s32 %v198, 8
    %s200 = sadd.s32 0, 0
    %s201 = smul.u32 %s200, 16
    %v202 = vstv %s201
    %v203 = vadd.s32 %v202, %v198
    %v204 = vadd.s32 %v202, %v199
    %vm205 = vcmp.lt.s32.totalorder %v203, 16
    %vm206 = vcmp.lt.s32.totalorder %v204, 16
    %v207 = vld [vmem:[#allocation2] sm:$0xff]
    %v208 = vld [vmem:[#allocation2 + $0x8] sm:$0xff]
    %v209 = vsel %vm205, %v195, 0.0
    %v210 = vsel %vm206, %v196, 0.0
    %v211 = vadd.f32 %v207, %v209
    %v212 = vadd.f32 %v208, %v210
    %vm213 = vcmask 7168
    %214 = vst.msk [vmem:[#allocation2] sm:$0xff] %vm213, %v211
    %215 = vst.msk [vmem:[#allocation2 + $0x8] sm:$0xff] %vm213, %v212
    // Predicated region
    $region22: #{tpu_custom_call.1} parent=1 // pred_check
      %p216 = pneg %p73
    $region23: #{tpu_custom_call.1} parent=1 // pred_check_branch
      %218 = sbr.rel (%p216) target = $region25
    $region24: #{tpu_custom_call.1} parent=1 // pred_region
      %v219 = vld [vmem:[#allocation2] sm:$0xff]
      %v220 = vld [vmem:[#allocation2 + $0x8] sm:$0xff]
      %v221 = vsel %vm213, %v219, 0.0
      %v222 = vsel %vm213, %v220, 0.0
      %v223 = vadd.f32 %v221, %v222
      %224 = vadd.xlane.f32.xlu0 %v223
      %v225 = vpop.xlane.xlu0 %224
      %v226 = vrot.slane %v225, 4
      %v227 = vadd.f32 %v225, %v226
      %v228 = vrot.slane %v227, 2
      %v229 = vadd.f32 %v227, %v228
      %v230 = vrot.slane %v229, 1
      %v231 = vadd.f32 %v229, %v230
      %s232 = vtos %v231
      %v233 = vstv %s232
      %v234 = vadd.f32 %v233, 0.0
      %235 = vst [vmem:[#allocation6] sm:$0xff] %v234
    $region25: #{tpu_custom_call.1} parent=1 // pred_fallthru
      _
    // Predicated region
    $region26: #{tpu_custom_call.1} parent=1 // pred_check
      _
    $region27: #{tpu_custom_call.1} parent=1 // pred_check_branch
      %237 = sbr.rel (0) target = $region29
    $region28: #{tpu_custom_call.1} parent=1 // pred_region
      %s239 = ssub.s32 128, 128
      %240 = vsyncadd [#allocation5], %s239
      %s242 = sshll.u32 [#allocation6], 4
      %s243 = int_to_ptr.vmem [resolvable:$true] %s242
      %245 = dma.vmem_to_hbm [thread:$0]  %s243, 128, %s3, [#allocation5]
    $region29: #{tpu_custom_call.1} parent=1 // pred_fallthru
      _
    // Predicated region
    $region30: #{tpu_custom_call.1} parent=1 // pred_check
      _
    $region31: #{tpu_custom_call.1} parent=1 // pred_check_branch
      %247 = sbr.rel (0) target = $region33
    $region32: #{tpu_custom_call.1} parent=1 // pred_region
      %248 = dma.done [#allocation5], 128
    $region33: #{tpu_custom_call.1} parent=1 // pred_fallthru
      _
    %249 = vsyncpa [#allocation4], 1
    %250 = vsyncpa [#allocation5], 1

</llo_original>
